<compile_context>
chip_gen: v5e
topology: v5e:2x2
jax: 0.10.0
libtpu: 0.0.40
codegen_flags: <defaults>
</compile_context>

<pallas_src>
import jax
import jax.numpy as jnp
from jax import lax
from jax.experimental import pallas as pl
from jax.experimental.pallas import tpu as pltpu


# ----------------------------------------------------------------------------
# Kernels
# ----------------------------------------------------------------------------

def _bn_row_kernel(x_ref, sb_ref, o_ref):
    # x_ref: (bm, bc) activation tile; sb_ref: (bm, 2) packed [scale, bias].
    x = x_ref[...].astype(jnp.float32)
    s = sb_ref[:, 0:1]                      # (bm, 1) broadcast over lanes
    b = sb_ref[:, 1:2]
    o_ref[...] = (x * s + b).astype(o_ref.dtype)
    # TODO(synk): fuse a neighboring ReLU / residual add here to save a full
    # extra HBM round trip (the VPU slot has huge slack in this kernel).


def _bn_col_kernel(x_ref, sb_ref, o_ref):
    # x_ref: (bm, bc) activation tile; sb_ref: (2, bc) packed [scale; bias].
    x = x_ref[...].astype(jnp.float32)
    s = sb_ref[0:1, :]                      # (1, bc) broadcast over sublanes
    b = sb_ref[1:2, :]
    o_ref[...] = (x * s + b).astype(o_ref.dtype)
    # TODO(synk): on v6e/v7x with bf16 inputs the FMA could stay in bf16 to
    # halve live vreg footprint; kept in f32 (mem-bound, wall-clock neutral).


# ----------------------------------------------------------------------------
# Tiling helpers
# ----------------------------------------------------------------------------

def _pick_block(dim, align, target):
    """Block size that is a multiple of `align` and <= target, or the full dim.

    Never returns more than max(dim, align-rounded target); non-dividing
    blocks are fine because the grid uses pl.cdiv (edge blocks are masked).
    """
    if dim <= target or dim <= align:
        return dim
    return max(align, (min(target, dim) // align) * align)


def _default_block_bytes():
    """Generation-tuned target block size (bytes)."""
    try:
        kind = jax.devices()[0].device_kind.lower()
    except Exception:  # pragma: no cover - fall back to a safe default
        return 2 * 1024 * 1024
    if "v7" in kind:
        return 8 * 1024 * 1024     # 3.2 TB/s: amortize ~0.35us/step overhead
    if "v6" in kind:
        return 4 * 1024 * 1024     # fits the 32 MiB scoped default
    return 2 * 1024 * 1024         # v5e (16 MiB scoped default) and others


# ----------------------------------------------------------------------------
# Wrapper
# ----------------------------------------------------------------------------

def frozen_batchnorm2d(x, weight, bias, running_mean, running_var, eps=1e-5,
                       target_block_bytes=None):
    """y = x * (w * rsqrt(rv + eps)) + (b - rm * w * rsqrt(rv + eps)), per channel."""
    N, C, H, W = x.shape
    f32 = jnp.float32

    # Fold the frozen affine once, in f32.
    scale_c = weight.astype(f32) * lax.rsqrt(running_var.astype(f32) + f32(eps))
    bias_c = bias.astype(f32) - running_mean.astype(f32) * scale_c

    if target_block_bytes is None:
        target_block_bytes = _default_block_bytes()

    itemsize = jnp.dtype(x.dtype).itemsize
    out_itemsize = itemsize
    sublane = max(8, 32 // itemsize)          # 8 f32, 16 bf16, 32 int8
    target_elems = max(sublane * 128, target_block_bytes // itemsize)

    hw = H * W
    row_layout = (hw % 128 == 0)

    if row_layout:
        # (N*C, H*W) view: per-row scale/bias, lane-dense since H*W % 128 == 0.
        rows, cols = N * C, hw
        x2 = x.reshape(rows, cols)
        sb = jnp.stack([jnp.tile(scale_c, N), jnp.tile(bias_c, N)], axis=1)  # (rows, 2)
    else:
        # (N, C*H*W) view: per-column scale/bias, lane-dense whenever C*H*W is
        # a multiple of 128 (ResNet 7x7/14x14/... layers with C % 128 == 0).
        rows, cols = N, C * hw
        x2 = x.reshape(rows, cols)
        sb = jnp.stack([jnp.repeat(scale_c, hw), jnp.repeat(bias_c, hw)], axis=0)  # (2, cols)

    # Budgeted block sizes: cap bc so that sublane * bc * itemsize <= budget,
    # then grow bm to fill the remaining element budget.
    bc = _pick_block(cols, 128, max(128, target_elems // sublane))
    bm = _pick_block(rows, sublane, max(sublane, target_elems // bc))

    # Make sure a degenerate (1, 1) grid is split when possible so v7x's two
    # TensorCores both get work (harmless on single-TC chips).
    if pl.cdiv(rows, bm) * pl.cdiv(cols, bc) == 1:
        if cols >= 256:
            bc = max(128, ((cols // 2) // 128) * 128)
        elif rows >= 2 * sublane:
            bm = max(sublane, ((rows // 2) // sublane) * sublane)

    if row_layout:
        grid = (pl.cdiv(rows, bm), pl.cdiv(cols, bc))        # inner axis = cols
        in_specs = [
            pl.BlockSpec((bm, bc), lambda i, j: (i, j)),
            pl.BlockSpec((bm, 2), lambda i, j: (i, 0)),      # fixed along inner axis
        ]
        out_spec = pl.BlockSpec((bm, bc), lambda i, j: (i, j))
        kernel = _bn_row_kernel
        param_buf_bytes = bm * 128 * 4                       # lane-padded f32 buffer
    else:
        grid = (pl.cdiv(cols, bc), pl.cdiv(rows, bm))        # inner axis = rows
        in_specs = [
            pl.BlockSpec((bm, bc), lambda j, i: (i, j)),
            pl.BlockSpec((2, bc), lambda j, i: (0, j)),      # fixed along inner axis
        ]
        out_spec = pl.BlockSpec((bm, bc), lambda j, i: (i, j))
        kernel = _bn_col_kernel
        param_buf_bytes = 8 * bc * 4                         # sublane-padded f32 buffer

    # Double-buffered VMEM footprint: 2x(in + out) activation tiles + params.
    vmem_need = (2 * bm * bc * (itemsize + out_itemsize)
                 + 2 * param_buf_bytes + (2 << 20))
    compiler_kwargs = dict(dimension_semantics=("parallel", "parallel"))
    if vmem_need > (16 << 20):        # beyond the smallest (v5e) scoped default
        compiler_kwargs["vmem_limit_bytes"] = int(min(48 << 20, vmem_need + (8 << 20)))

    out2 = pl.pallas_call(
        kernel,
        out_shape=jax.ShapeDtypeStruct((rows, cols), x.dtype),
        grid=grid,
        in_specs=in_specs,
        out_specs=out_spec,
        compiler_params=pltpu.CompilerParams(**compiler_kwargs),
    )(x2, sb)

    return out2.reshape(N, C, H, W)


# ----------------------------------------------------------------------------
# Reference + tests
# ----------------------------------------------------------------------------

def frozen_batchnorm2d_ref(x, weight, bias, running_mean, running_var, eps=1e-5):
    w = weight.reshape(1, -1, 1, 1).astype(jnp.float32)
    b = bias.reshape(1, -1, 1, 1).astype(jnp.float32)
    rv = running_var.reshape(1, -1, 1, 1).astype(jnp.float32)
    rm = running_mean.reshape(1, -1, 1, 1).astype(jnp.float32)
    scale = w * lax.rsqrt(rv + eps)
    return (x.astype(jnp.float32) * scale + (b - rm * scale)).astype(x.dtype)


if __name__ == "__main__":
    key = jax.random.PRNGKey(0)

    # --- Test 1: H*W multiple of 128 -> row-broadcast layout ----------------
    kx, kw, kb, km, kv = jax.random.split(key, 5)
    N, C, H, W = 2, 4, 16, 16
    x = jax.random.normal(kx, (N, C, H, W), dtype=jnp.float32)
    weight = 1.0 + 0.1 * jax.random.normal(kw, (C,), dtype=jnp.float32)
    bias = 0.1 * jax.random.normal(kb, (C,), dtype=jnp.float32)
    running_mean = 0.2 * jax.random.normal(km, (C,), dtype=jnp.float32)
    running_var = jnp.abs(1.0 + 0.1 * jax.random.normal(kv, (C,), dtype=jnp.float32))

    out = jax.block_until_ready(
        frozen_batchnorm2d(x, weight, bias, running_mean, running_var))
    ref = frozen_batchnorm2d_ref(x, weight, bias, running_mean, running_var)
    assert out.shape == (N, C, H, W) and out.dtype == x.dtype
    assert jnp.allclose(out, ref, atol=1e-5, rtol=1e-5)

    # --- Test 2: odd H*W (7x7) -> lane-dense column layout, multi-block grid
    k2x, k2w, k2b, k2m, k2v = jax.random.split(jax.random.PRNGKey(1), 5)
    N2, C2, H2, W2 = 2, 128, 7, 7
    x2 = jax.random.normal(k2x, (N2, C2, H2, W2), dtype=jnp.float32)
    w2 = 1.0 + 0.1 * jax.random.normal(k2w, (C2,), dtype=jnp.float32)
    b2 = 0.1 * jax.random.normal(k2b, (C2,), dtype=jnp.float32)
    m2 = 0.2 * jax.random.normal(k2m, (C2,), dtype=jnp.float32)
    v2 = jnp.abs(1.0 + 0.1 * jax.random.normal(k2v, (C2,), dtype=jnp.float32))

    out2 = jax.block_until_ready(
        frozen_batchnorm2d(x2, w2, b2, m2, v2, target_block_bytes=64 * 1024))
    ref2 = frozen_batchnorm2d_ref(x2, w2, b2, m2, v2)
    assert jnp.allclose(out2, ref2, atol=1e-5, rtol=1e-5)

    # --- Test 3: bf16 input (sublane packing = 16, f32 math, bf16 store) ----
    k3 = jax.random.split(jax.random.PRNGKey(2), 5)
    N3, C3, H3, W3 = 2, 8, 16, 16
    x3 = jax.random.normal(k3[0], (N3, C3, H3, W3), dtype=jnp.float32).astype(jnp.bfloat16)
    w3 = 1.0 + 0.1 * jax.random.normal(k3[1], (C3,), dtype=jnp.float32)
    b3 = 0.1 * jax.random.normal(k3[2], (C3,), dtype=jnp.float32)
    m3 = 0.2 * jax.random.normal(k3[3], (C3,), dtype=jnp.float32)
    v3 = jnp.abs(1.0 + 0.1 * jax.random.normal(k3[4], (C3,), dtype=jnp.float32))

    out3 = jax.block_until_ready(frozen_batchnorm2d(x3, w3, b3, m3, v3))
    ref3 = frozen_batchnorm2d_ref(x3, w3, b3, m3, v3)
    assert out3.dtype == jnp.bfloat16
    assert jnp.allclose(out3.astype(jnp.float32), ref3.astype(jnp.float32),
                        atol=1e-2, rtol=1e-2)

    print("KERNEL_OK")
</pallas_src>

<mosaic_0001>
module attributes {stable_mosaic.version = 11 : i64} {
  func.func @_bn_row_kernel(%arg0: i32, %arg1: i32, %arg2: memref<8x128xf32, #tpu.memory_space<vmem>>, %arg3: memref<8x2xf32, #tpu.memory_space<vmem>>, %arg4: memref<8x128xf32, #tpu.memory_space<vmem>>) attributes {dimension_semantics = [#tpu.dimension_semantics<parallel>, #tpu.dimension_semantics<parallel>], iteration_bounds = array<i64: 1, 2>, scalar_prefetch = 0 : i64, scratch_operands = 0 : i64, tpu.core_type = #tpu.core_type<tc>, window_params = [{transform_indices = @transform_0, window_bounds = array<i64: 8, 128>}, {transform_indices = @transform_1, window_bounds = array<i64: 8, 2>}, {transform_indices = @transform_2, window_bounds = array<i64: 8, 128>}]} {
    %c0 = arith.constant 0 : index
    %c0_0 = arith.constant 0 : index
    %0 = vector.load %arg2[%c0, %c0_0] : memref<8x128xf32, #tpu.memory_space<vmem>>, vector<8x128xf32>
    %c0_1 = arith.constant 0 : index
    %c0_2 = arith.constant 0 : index
    %1 = vector.load %arg3[%c0_1, %c0_2] : memref<8x2xf32, #tpu.memory_space<vmem>>, vector<8x1xf32>
    %c0_3 = arith.constant 0 : index
    %c1 = arith.constant 1 : index
    %2 = vector.load %arg3[%c0_3, %c1] : memref<8x2xf32, #tpu.memory_space<vmem>>, vector<8x1xf32>
    %3 = vector.broadcast %1 : vector<8x1xf32> to vector<8x128xf32>
    %4 = arith.mulf %0, %3 : vector<8x128xf32>
    %5 = vector.broadcast %2 : vector<8x1xf32> to vector<8x128xf32>
    %6 = arith.addf %4, %5 : vector<8x128xf32>
    %c0_4 = arith.constant 0 : index
    %c0_5 = arith.constant 0 : index
    %7 = vector.load %arg4[%c0_4, %c0_5] : memref<8x128xf32, #tpu.memory_space<vmem>>, vector<8x128xf32>
    tpu.vector_store %arg4[%c0_4, %c0_5], %6 {strides = array<i32>} : memref<8x128xf32, #tpu.memory_space<vmem>>, vector<8x128xf32>,
    return
  }
  func.func @transform_0(%arg0: i32, %arg1: i32) -> (i32, i32) {
    %c0_i32 = arith.constant 0 : i32
    return %arg0, %arg1 : i32, i32
  }
  func.func @transform_1(%arg0: i32, %arg1: i32) -> (i32, i32) {
    %c0_i32 = arith.constant 0 : i32
    %c0_i32_0 = arith.constant 0 : i32
    return %arg0, %c0_i32 : i32, i32
  }
  func.func @transform_2(%arg0: i32, %arg1: i32) -> (i32, i32) {
    %c0_i32 = arith.constant 0 : i32
    return %arg0, %arg1 : i32, i32
  }
}

</mosaic_0001>

<llo_original>
// kernel: tpu_custom_call.1
$region0: #{tpu_custom_call.1}
  #allocation0 [shape = 'u32[]', space=smem, size = 0x4, offset = 0x4, fixed_abs, tag = 'smem constant byte address 0x4 - core index']
  #allocation1 [shape = 'u32[72,128]{1,0:T(1,128)}', space=vmem, size = 0x9000, scoped, tag = 'internal scratch']
  %s0 = inlined_call_operand.hbm [shape: f32[8,256], index: 0, kind: input, shape index: {}]
  %s1 = inlined_call_operand.vmem [shape: f32[8,2], index: 1, kind: input, shape index: {}]
  %s2 = inlined_call_operand.hbm [shape: f32[8,256], index: 2, kind: output, shape index: {}]
  %s3 = sld [smem:[#allocation0]]
  $region45: #{tpu_custom_call.1} parent=0
    _
  %s5 = ssub.s32 1, %s3
  %s6 = scalar_select 0, %s5, %s3
  $region1: #{tpu_custom_call.1} parent=0
    #allocation2 [shape = 'u8[8192]{0}', space=vmem, size = 0x2000, scoped, tag = 'input window, operand 0']
    #allocation3 [shape = 's32[2]{0}', space=sflag, size = 0x8, scoped, tag = 'scoped memory for tpu_custom_call.1']
    #allocation4 [shape = 's32[2]{0}', space=sflag, size = 0x8, scoped, tag = 'scoped memory for tpu_custom_call.1']
    #allocation5 [shape = 'u8[8192]{0}', space=vmem, size = 0x2000, scoped, tag = 'output window, operand 0']
    %7 = vsyncpa [#allocation3], 0
    %s8 = scalar_lea.sflag [#allocation3], 1
    %9 = vsyncpa %s8, 0
    %10 = vsyncpa [#allocation4], 0
    %s11 = scalar_lea.sflag [#allocation4], 1
    %12 = vsyncpa %s11, 0
    loop: start=0, step=1, limit=4
    $region2: #{tpu_custom_call.1} parent=1 // loop_pre_header
      _
    $region3: #{tpu_custom_call.1} parent=1 // loop_header
      %s14 = sphi 0, %s18
      %p15 = scmp.ge.s32.totalorder %s14, 4
      %s21 = sphi 0, %s33
      %s22 = sphi 0, %s29
      %s23 = sphi 0, %s21
      %s24 = sphi 0, %s22
      %s25 = sphi 0, %s23
      %s26 = sphi 0, %s24
      %s38 = sphi 0, %s40
      %s41 = sphi 0, %s38
      %s42 = sphi 0, %s41
      %s58 = sphi 0, %s42
      %s64 = sphi 0, %s66
      %s67 = sphi 0, %s64
      %s68 = sphi 0, %s67
      %s84 = sphi 0, %s68
      %s92 = sphi 0, %s94
      %s95 = sphi 0, %s92
      %s96 = sphi 0, %s95
      %s112 = sphi 0, %s96
    $region4: #{tpu_custom_call.1} parent=1 // loop_header_branch
      %17 = sbr.rel (%p15) target = $region8
    $region5: #{tpu_custom_call.1} parent=1 // loop_body
      %s19 = ssub.s32 %s14, 1
      %s20 = ssub.s32 %s14, 2
      %s27 = sadd.s32 1, %s22
      %p28 = scmp.ge.s32.totalorder %s27, 2
      %s29 = scalar_select %p28, 0, %s27
      %s30 = sadd.s32 1, %s21
      %s31 = scalar_select %p28, %s30, %s21
      %p32 = scmp.ge.s32.totalorder %s31, 1
      %s33 = scalar_select %p32, 0, %s31
      %s34 = ssub.s32 %s21, %s33
      %s35 = ssub.s32 %s22, %s29
      %s36 = sor.u32 %s34, %s35
      %p37 = scmp.eq.s32.totalorder %s36, 0
      %s39 = sadd.s32 %s38, 1
      %s40 = scalar_select %p37, %s38, %s39
      %p43 = pneg %p37
      %p44 = scmp.eq.s32.totalorder %s14, 1
      %p45 = por %p43, %p44
      %p46 = scmp.ne.s32.totalorder %s38, %s41
      %p47 = scmp.eq.s32.totalorder %s14, 0
      %p48 = por %p46, %p47
      %p49 = scmp.ne.s32.totalorder %s38, %s41
      %p50 = scmp.eq.s32.totalorder %s19, 1
      %p51 = por %p49, %p50
      %p52 = scmp.ne.s32.totalorder %s41, %s42
      %p53 = scmp.eq.s32.totalorder %s19, 0
      %p54 = por %p52, %p53
      %p55 = scmp.ne.s32.totalorder %s41, %s42
      %p56 = scmp.eq.s32.totalorder %s20, 1
      %p57 = por %p55, %p56
      %p59 = scmp.ne.s32.totalorder %s42, %s58
      %p60 = scmp.eq.s32.totalorder %s20, 0
      %p61 = por %p59, %p60
      %s62 = ssub.s32 %s21, %s33
      %p63 = scmp.eq.s32.totalorder %s62, 0
      %s65 = sadd.s32 %s64, 1
      %s66 = scalar_select %p63, %s64, %s65
      %p69 = pneg %p63
      %p70 = scmp.eq.s32.totalorder %s14, 1
      %p71 = por %p69, %p70
      %p72 = scmp.ne.s32.totalorder %s64, %s67
      %p73 = scmp.eq.s32.totalorder %s14, 0
      %p74 = por %p72, %p73
      %p75 = scmp.ne.s32.totalorder %s64, %s67
      %p76 = scmp.eq.s32.totalorder %s19, 1
      %p77 = por %p75, %p76
      %p78 = scmp.ne.s32.totalorder %s67, %s68
      %p79 = scmp.eq.s32.totalorder %s19, 0
      %p80 = por %p78, %p79
      %p81 = scmp.ne.s32.totalorder %s67, %s68
      %p82 = scmp.eq.s32.totalorder %s20, 1
      %p83 = por %p81, %p82
      %p85 = scmp.ne.s32.totalorder %s68, %s84
      %p86 = scmp.eq.s32.totalorder %s20, 0
      %p87 = por %p85, %p86
      %s88 = ssub.s32 %s21, %s33
      %s89 = ssub.s32 %s22, %s29
      %s90 = sor.u32 %s88, %s89
      %p91 = scmp.eq.s32.totalorder %s90, 0
      %s93 = sadd.s32 %s92, 1
      %s94 = scalar_select %p91, %s92, %s93
      %p97 = pneg %p91
      %p98 = scmp.eq.s32.totalorder %s14, 1
      %p99 = por %p97, %p98
      %p100 = scmp.ne.s32.totalorder %s92, %s95
      %p101 = scmp.eq.s32.totalorder %s14, 0
      %p102 = por %p100, %p101
      %p103 = scmp.ne.s32.totalorder %s92, %s95
      %p104 = scmp.eq.s32.totalorder %s19, 1
      %p105 = por %p103, %p104
      %p106 = scmp.ne.s32.totalorder %s95, %s96
      %p107 = scmp.eq.s32.totalorder %s19, 0
      %p108 = por %p106, %p107
      %p109 = scmp.ne.s32.totalorder %s95, %s96
      %p110 = scmp.eq.s32.totalorder %s20, 1
      %p111 = por %p109, %p110
      %p113 = scmp.ne.s32.totalorder %s96, %s112
      %p114 = scmp.eq.s32.totalorder %s20, 0
      %p115 = por %p113, %p114
      %p116 = scmp.le.s32.totalorder 1, %s14
      %p117 = scmp.lt.s32.totalorder %s14, 3
      %p118 = pnand %p116, %p117
      %p119 = pneg %p118
      // Predicated region
      $region9: #{tpu_custom_call.1} parent=5 // pred_check
        _
      $region10: #{tpu_custom_call.1} parent=5 // pred_check_branch
        %121 = sbr.rel (%p118) target = $region12
      $region11: #{tpu_custom_call.1} parent=5 // pred_region
        %s122 = ssub.s32 %s14, 1
        // Predicated region
        $region13: #{tpu_custom_call.1} parent=11 // pred_check
          %p123 = pneg %p80
        $region14: #{tpu_custom_call.1} parent=11 // pred_check_branch
          %125 = sbr.rel (%p123) target = $region16
        $region15: #{tpu_custom_call.1} parent=11 // pred_region
          %p126 = scmp.lt.s32.totalorder %s23, 0
          %s127 = scalar_select %p126, %s23, 0
          %s128 = smul.addr %s127, 8
          %s129 = scalar_lea.vmem %s1, %s128
        $region16: #{tpu_custom_call.1} parent=11 // pred_fallthru
          _
      $region12: #{tpu_custom_call.1} parent=5 // pred_fallthru
        _
      %p130 = scmp.lt.s32.totalorder %s14, 2
      // Predicated region
      $region17: #{tpu_custom_call.1} parent=5 // pred_check
        %p131 = pneg %p130
      $region18: #{tpu_custom_call.1} parent=5 // pred_check_branch
        %133 = sbr.rel (%p131) target = $region20
      $region19: #{tpu_custom_call.1} parent=5 // pred_region
        // Predicated region
        $region21: #{tpu_custom_call.1} parent=19 // pred_check
          %p134 = pneg %p48
        $region22: #{tpu_custom_call.1} parent=19 // pred_check_branch
          %136 = sbr.rel (%p134) target = $region24
        $region23: #{tpu_custom_call.1} parent=19 // pred_region
          %s137 = sand.u32 %s38, 1
          %s138 = scalar_lea.sflag [#allocation3], %s137
          %s139 = sand.u32 %s38, 1
          %s140 = smul.addr %s139, 8
          %s141 = scalar_lea.vmem [#allocation2], %s140
          %143 = vsyncadd %s138, 0
          %s144 = smul.addr %s21, 2
          %s145 = sadd.s32 %s22, %s144
          %s146 = smul.addr %s145, 8
          %s147 = scalar_lea.hbm %s0, %s146
          %s149 = sshll.u32 %s147, 4
          %s150 = int_to_ptr.hbm [resolvable:$true] %s149
          %s151 = sshll.u32 %s141, 4
          %s152 = int_to_ptr.vmem [resolvable:$true] %s151
          %154 = dma.hbm_to_vmem [thread:$0]  %s150, 128, %s152, %s138
        $region24: #{tpu_custom_call.1} parent=19 // pred_fallthru
          _
      $region20: #{tpu_custom_call.1} parent=5 // pred_fallthru
        _
      %p155 = scmp.le.s32.totalorder 1, %s14
      %p156 = scmp.lt.s32.totalorder %s14, 3
      %p157 = pnand %p155, %p156
      %p158 = pneg %p157
      // Predicated region
      $region25: #{tpu_custom_call.1} parent=5 // pred_check
        _
      $region26: #{tpu_custom_call.1} parent=5 // pred_check_branch
        %160 = sbr.rel (%p157) target = $region28
      $region27: #{tpu_custom_call.1} parent=5 // pred_region
        %s161 = ssub.s32 %s14, 1
        %s162 = sand.u32 %s41, 1
        %s163 = scalar_lea.sflag [#allocation3], %s162
        %s164 = sand.u32 %s41, 1
        %s165 = smul.addr %s164, 8
        %s166 = scalar_lea.vmem [#allocation2], %s165
        // Predicated region
        $region29: #{tpu_custom_call.1} parent=27 // pred_check
          %p167 = pneg %p54
        $region30: #{tpu_custom_call.1} parent=27 // pred_check_branch
          %169 = sbr.rel (%p167) target = $region32
        $region31: #{tpu_custom_call.1} parent=27 // pred_region
          %171 = dma.done %s163, 128
        $region32: #{tpu_custom_call.1} parent=27 // pred_fallthru
          _
        %s172 = sand.u32 %s41, 1
        %s173 = scalar_lea.sflag [#allocation3], %s172
        %s174 = sand.u32 %s41, 1
        %s175 = smul.addr %s174, 8
        %s176 = scalar_lea.vmem [#allocation2], %s175
        %p177 = pneg %p54
        %p178 = pneg %p51
        %p179 = scmp.lt.s32.totalorder %s23, 0
        %s180 = scalar_select %p179, %s23, 0
        %s181 = smul.addr %s180, 8
        %s182 = scalar_lea.vmem %s1, %s181
        %p183 = pneg %p80
        %p184 = pneg %p77
        %p185 = pneg %p108
        %p186 = pneg %p105
        %s187 = sand.u32 %s95, 1
        %s188 = scalar_lea.sflag [#allocation4], %s187
        %s189 = sand.u32 %s95, 1
        %s190 = smul.addr %s189, 8
        %s191 = scalar_lea.vmem [#allocation5], %s190
        %p192 = scmp.lt.s32.totalorder %s23, 0
        %s193 = scalar_select %p192, %s23, 0
        %s194 = smul.addr %s193, 8
        %s195 = scalar_lea.vmem %s1, %s194
        %v196 = vld [vmem:[%s166] sm:$0xff]
        %v197 = vld [vmem:[%s195] sm:$0xff]
        %199 = vset.pattern.permute.xlu0 0
        %200 = vperm.xlu0 %199, %v197
        %v201 = vpop.permute.xlu0 %200
        %v203 = vmul.f32 %v196, %v201
        %204 = vset.pattern.permute.xlu0 1
        %205 = vperm.xlu0 %204, %v197
        %v206 = vpop.permute.xlu0 %205
        %v208 = vadd.f32 %v203, %v206
        %209 = vst [vmem:[%s191] sm:$0xff] %v208
        %s210 = sand.u32 %s95, 1
        %s211 = scalar_lea.sflag [#allocation4], %s210
        %s212 = sand.u32 %s95, 1
        %s213 = smul.addr %s212, 8
        %s214 = scalar_lea.vmem [#allocation5], %s213
        // Predicated region
        $region33: #{tpu_custom_call.1} parent=27 // pred_check
          %p215 = pneg %p105
        $region34: #{tpu_custom_call.1} parent=27 // pred_check_branch
          %217 = sbr.rel (%p215) target = $region36
        $region35: #{tpu_custom_call.1} parent=27 // pred_region
          %219 = vsyncadd %s211, 0
          %s220 = smul.addr %s23, 2
          %s221 = sadd.s32 %s24, %s220
          %s222 = smul.addr %s221, 8
          %s223 = scalar_lea.hbm %s2, %s222
          %s225 = sshll.u32 %s214, 4
          %s226 = int_to_ptr.vmem [resolvable:$true] %s225
          %s227 = sshll.u32 %s223, 4
          %s228 = int_to_ptr.hbm [resolvable:$true] %s227
          %230 = dma.vmem_to_hbm [thread:$0]  %s226, 128, %s228, %s211
        $region36: #{tpu_custom_call.1} parent=27 // pred_fallthru
          _
      $region28: #{tpu_custom_call.1} parent=5 // pred_fallthru
        _
      %p231 = scmp.le.s32.totalorder 2, %s14
      // Predicated region
      $region37: #{tpu_custom_call.1} parent=5 // pred_check
        %p232 = pneg %p231
      $region38: #{tpu_custom_call.1} parent=5 // pred_check_branch
        %234 = sbr.rel (%p232) target = $region40
      $region39: #{tpu_custom_call.1} parent=5 // pred_region
        %s235 = ssub.s32 %s14, 2
        // Predicated region
        $region41: #{tpu_custom_call.1} parent=39 // pred_check
          %p236 = pneg %p111
        $region42: #{tpu_custom_call.1} parent=39 // pred_check_branch
          %238 = sbr.rel (%p236) target = $region44
        $region43: #{tpu_custom_call.1} parent=39 // pred_region
          %s239 = sand.u32 %s96, 1
          %s240 = scalar_lea.sflag [#allocation4], %s239
          %s241 = sand.u32 %s96, 1
          %s242 = smul.addr %s241, 8
          %s243 = scalar_lea.vmem [#allocation5], %s242
          %245 = dma.done %s240, 128
        $region44: #{tpu_custom_call.1} parent=39 // pred_fallthru
          _
      $region40: #{tpu_custom_call.1} parent=5 // pred_fallthru
        _
    $region6: #{tpu_custom_call.1} parent=1 // loop_footer
      %s18 = sadd.s32 1, %s14
    $region7: #{tpu_custom_call.1} parent=1 // loop_footer_branch
      %13 = sbr.rel target = $region3
    $region8: #{tpu_custom_call.1} parent=1 // loop_exit
      _
    %246 = vsyncpa [#allocation3], 1
    %s247 = scalar_lea.sflag [#allocation3], 1
    %248 = vsyncpa %s247, 1
    %249 = vsyncpa [#allocation4], 1
    %s250 = scalar_lea.sflag [#allocation4], 1
    %251 = vsyncpa %s250, 1

</llo_original>
